<compile_context>
chip_gen: v6e
topology: v6e:2x2x1
jax: 0.10.0
libtpu: 0.0.40
codegen_flags: <defaults>
</compile_context>

<pallas_src>
import functools

import jax
import jax.numpy as jnp
from jax.experimental import pallas as pl
from jax.experimental.pallas import tpu as pltpu


def self_attention_kernel(maxlen_ref, len_ref, x_ref, w_ref, repr_ref, scores_ref):
    x = x_ref[...]            # (TB, L, H) f32
    w = w_ref[...]            # (1, H)     f32
    lengths = len_ref[...]    # (TB, 1)    int32
    tb, seq_len, _ = x.shape

    # Raw attention scores: contraction over H (VPU mul + lane reduce), tanh on EUP.
    # Kept off the MXU on purpose: the MXU forms are N=1 / M=1-per-batch matmuls
    # plus a (.,1)->(TB,L) relayout, and this kernel is HBM-bound with VPU slack.
    raw = jnp.sum(x * w[0][None, None, :], axis=-1)               # (TB, L)
    s = jnp.tanh(raw)

    # torch get_mask(): rows whose length equals the GLOBAL batch max get an
    # all-ones mask; shorter rows are masked past their length.  The global max
    # arrives via scalar prefetch, so batch tiling does not change semantics.
    max_len = maxlen_ref[0]
    idx = jax.lax.broadcasted_iota(jnp.int32, (tb, seq_len), 1)
    mask = jnp.where(lengths == max_len, 1.0,
                     (idx < lengths).astype(jnp.float32))         # (TB, L)

    # softmax -> mask -> renormalize collapses to one normalization:
    #   scores = mask*exp(s-m) / sum(mask*exp(s-m))
    m = jnp.max(s, axis=-1, keepdims=True)
    e = mask * jnp.exp(s - m)
    denom = jnp.sum(e, axis=-1, keepdims=True)
    inv = pl.reciprocal(denom, approx=True)       # EUP slot instead of VPU divide
    inv = inv * (2.0 - denom * inv)               # one Newton step -> f32 accuracy
    scores = e * inv                              # (TB, L)
    # NOTE: rows with length == 0 (denom == 0) produce NaN, same as the torch code.

    scores_ref[...] = scores
    # Representations: weighted sum over the sequence axis.
    repr_ref[...] = jnp.sum(x * scores[:, :, None], axis=1)       # (TB, H)


def _round_up(n, m):
    return ((n + m - 1) // m) * m


def _choose_batch_tile(batch, seq_len, hidden, x_block_budget_bytes=2 * 1024 * 1024):
    """Largest batch tile whose x-block fits the per-buffer VMEM budget.

    Accounts for the (8, 128) VMEM tiling padding of the last two dims so the
    double-buffered footprint stays well inside v7x's 64 MiB VMEM (and the
    32 MiB scoped default) while remaining large enough to amortize per-step
    pipeline overhead on v5e/v6e.
    """
    row_bytes = _round_up(seq_len, 8) * _round_up(hidden, 128) * 4
    tb = max(1, x_block_budget_bytes // row_bytes)
    if tb >= batch:
        return batch
    return max(8, (tb // 8) * 8)   # sublane-aligned tiles when the batch is split


@functools.partial(jax.jit, static_argnames=("batch_tile",))
def self_attention(inputs, lengths, attention_weights, *, batch_tile=None):
    """inputs: (B, L, H) float, lengths: (B,) int, attention_weights: (H,) float."""
    B, L, H = inputs.shape
    x = inputs.astype(jnp.float32)
    w2d = attention_weights.astype(jnp.float32).reshape(1, H)
    lens = lengths.astype(jnp.int32).reshape(B)

    # Global max length (torch: max(lengths)); scalar-prefetched into SMEM.
    max_len = jnp.max(lens).reshape(1)

    tb = batch_tile if batch_tile is not None else _choose_batch_tile(B, L, H)
    b_pad = _round_up(B, tb)
    if b_pad != B:
        x = jnp.pad(x, ((0, b_pad - B), (0, 0), (0, 0)))
        # pad with length 1 (not 0) so padded rows don't generate NaNs.
        lens = jnp.pad(lens, (0, b_pad - B), constant_values=1)
    len2d = lens.reshape(b_pad, 1)

    grid = (b_pad // tb,)
    reprs, scores = pl.pallas_call(
        self_attention_kernel,
        out_shape=(jax.ShapeDtypeStruct((b_pad, H), jnp.float32),
                   jax.ShapeDtypeStruct((b_pad, L), jnp.float32)),
        grid_spec=pltpu.PrefetchScalarGridSpec(
            num_scalar_prefetch=1,                                  # max_len -> SMEM
            grid=grid,
            in_specs=[
                pl.BlockSpec((tb, 1), lambda i, ml: (i, 0)),        # lengths
                pl.BlockSpec((tb, L, H), lambda i, ml: (i, 0, 0)),  # inputs
                pl.BlockSpec((1, H), lambda i, ml: (0, 0)),         # attention weights
            ],
            out_specs=(
                pl.BlockSpec((tb, H), lambda i, ml: (i, 0)),        # representations
                pl.BlockSpec((tb, L), lambda i, ml: (i, 0)),        # scores
            ),
        ),
        compiler_params=pltpu.CompilerParams(
            dimension_semantics=("parallel",),    # shard grid steps across TCs (v7x)
            vmem_limit_bytes=48 * 1024 * 1024,    # > 32 MiB scoped default, < v7x physical
        ),
    )(max_len, len2d, x, w2d)

    reprs = reprs[:B]
    scores = scores[:B]
    if B == 1:
        reprs = reprs[0]   # torch .squeeze() on the representations
    return reprs, scores


def reference(inputs, lengths, w):
    # pure-JAX reference for sanity checking
    s = jnp.tanh(inputs @ w)
    sm = jax.nn.softmax(s, axis=-1)
    B, L, _ = inputs.shape
    idx = jnp.arange(L)[None, :]
    max_len = jnp.max(lengths)
    mask = jnp.where(lengths[:, None] == max_len,
                     jnp.ones((B, L), jnp.float32),
                     (idx < lengths[:, None]).astype(jnp.float32))
    masked = sm * mask
    scores = masked / jnp.sum(masked, axis=-1, keepdims=True)
    reprs = jnp.sum(inputs * scores[:, :, None], axis=1)
    return reprs, scores


if __name__ == "__main__":
    B, L, H = 2, 8, 32   # batch, seq (attention/softmax dim), hidden (= attention_size)

    key = jax.random.PRNGKey(0)
    k_x, k_w = jax.random.split(key)

    inputs = jax.random.normal(k_x, (B, L, H), dtype=jnp.float32)
    # nn.init.uniform(attention_weights, -0.005, 0.005)
    attention_weights = jax.random.uniform(
        k_w, (H,), dtype=jnp.float32, minval=-0.005, maxval=0.005)
    lengths = jnp.array([8, 5], dtype=jnp.int32)

    reprs, scores = self_attention(inputs, lengths, attention_weights)
    reprs = jax.block_until_ready(reprs)
    scores = jax.block_until_ready(scores)

    r_ref, s_ref = reference(inputs, lengths, attention_weights)
    assert reprs.shape == (B, H) and scores.shape == (B, L)
    assert jnp.allclose(reprs, r_ref, atol=1e-4, rtol=1e-4), "representations mismatch"
    assert jnp.allclose(scores, s_ref, atol=1e-4, rtol=1e-4), "scores mismatch"

    print("KERNEL_OK")
</pallas_src>

<mosaic_0001>
module attributes {stable_mosaic.version = 11 : i64} {
  func.func @self_attention_kernel(%arg0: i32, %arg1: memref<1xi32, #tpu.memory_space<smem>>, %arg2: memref<2x1xi32, #tpu.memory_space<vmem>>, %arg3: memref<2x8x32xf32, #tpu.memory_space<vmem>>, %arg4: memref<1x32xf32, #tpu.memory_space<vmem>>, %arg5: memref<2x32xf32, #tpu.memory_space<vmem>>, %arg6: memref<2x8xf32, #tpu.memory_space<vmem>>) attributes {dimension_semantics = [#tpu.dimension_semantics<parallel>], iteration_bounds = array<i64: 1>, scalar_prefetch = 1 : i64, scratch_operands = 0 : i64, tpu.core_type = #tpu.core_type<tc>, window_params = [{transform_indices = @transform_0, window_bounds = array<i64: 2, 1>}, {transform_indices = @transform_1, window_bounds = array<i64: 2, 8, 32>}, {pipeline_mode = #tpu.pipeline_mode<synchronous>, transform_indices = @transform_2, window_bounds = array<i64: 1, 32>}, {transform_indices = @transform_3, window_bounds = array<i64: 2, 32>}, {transform_indices = @transform_4, window_bounds = array<i64: 2, 8>}]} {
    %c0 = arith.constant 0 : index
    %c0_0 = arith.constant 0 : index
    %c0_1 = arith.constant 0 : index
    %0 = vector.load %arg3[%c0, %c0_0, %c0_1] : memref<2x8x32xf32, #tpu.memory_space<vmem>>, vector<2x8x32xf32>
    %c0_2 = arith.constant 0 : index
    %c0_3 = arith.constant 0 : index
    %1 = vector.load %arg4[%c0_2, %c0_3] : memref<1x32xf32, #tpu.memory_space<vmem>>, vector<1x32xf32>
    %c0_4 = arith.constant 0 : index
    %c0_5 = arith.constant 0 : index
    %2 = vector.load %arg2[%c0_4, %c0_5] : memref<2x1xi32, #tpu.memory_space<vmem>>, vector<2x1xi32>
    %3 = vector.shape_cast %1 : vector<1x32xf32> to vector<32xf32>
    %4 = vector.shape_cast %3 : vector<32xf32> to vector<1x1x32xf32>
    %5 = vector.broadcast %4 : vector<1x1x32xf32> to vector<2x8x32xf32>
    %6 = arith.mulf %0, %5 : vector<2x8x32xf32>
    %cst = arith.constant dense<0.000000e+00> : vector<2x8xf32>
    %7 = vector.multi_reduction <add>, %6, %cst [2] : vector<2x8x32xf32> to vector<2x8xf32>
    %8 = math.tanh %7 : vector<2x8xf32>
    %c0_6 = arith.constant 0 : index
    %9 = memref.load %arg1[%c0_6] : memref<1xi32, #tpu.memory_space<smem>>
    %10 = tpu.iota {dimensions = array<i32: 1>} : vector<2x8xi32>
    %11 = vector.broadcast %9 : i32 to vector<2x1xi32>
    %12 = arith.cmpi eq, %2, %11 : vector<2x1xi32>
    %13 = vector.broadcast %2 : vector<2x1xi32> to vector<2x8xi32>
    %14 = arith.cmpi slt, %10, %13 : vector<2x8xi32>
    %15 = arith.extui %14 : vector<2x8xi1> to vector<2x8xi32>
    %16 = arith.sitofp %15 : vector<2x8xi32> to vector<2x8xf32>
    %cst_7 = arith.constant 1.000000e+00 : f32
    %17 = vector.shape_cast %12 : vector<2x1xi1> to vector<2x1xi1>
    %18 = vector.broadcast %17 : vector<2x1xi1> to vector<2x8xi1>
    %19 = vector.broadcast %cst_7 : f32 to vector<2x8xf32>
    %20 = arith.select %18, %19, %16 : vector<2x8xi1>, vector<2x8xf32>
    %cst_8 = arith.constant dense<0xFF800000> : vector<2xf32>
    %21 = vector.multi_reduction <maximumf>, %8, %cst_8 [1] : vector<2x8xf32> to vector<2xf32>
    %22 = vector.shape_cast %21 : vector<2xf32> to vector<2x1xf32>
    %23 = vector.broadcast %22 : vector<2x1xf32> to vector<2x8xf32>
    %24 = arith.subf %8, %23 : vector<2x8xf32>
    %25 = math.exp %24 : vector<2x8xf32>
    %26 = arith.mulf %20, %25 : vector<2x8xf32>
    %cst_9 = arith.constant dense<0.000000e+00> : vector<2xf32>
    %27 = vector.multi_reduction <add>, %26, %cst_9 [1] : vector<2x8xf32> to vector<2xf32>
    %28 = vector.shape_cast %27 : vector<2xf32> to vector<2x1xf32>
    %29 = tpu.reciprocal %28 {approx = true} : vector<2x1xf32> -> vector<2x1xf32>
    %30 = arith.mulf %28, %29 : vector<2x1xf32>
    %cst_10 = arith.constant 2.000000e+00 : f32
    %31 = vector.broadcast %cst_10 : f32 to vector<2x1xf32>
    %32 = arith.subf %31, %30 : vector<2x1xf32>
    %33 = arith.mulf %29, %32 : vector<2x1xf32>
    %34 = vector.broadcast %33 : vector<2x1xf32> to vector<2x8xf32>
    %35 = arith.mulf %26, %34 : vector<2x8xf32>
    %c0_11 = arith.constant 0 : index
    %c0_12 = arith.constant 0 : index
    %36 = vector.load %arg6[%c0_11, %c0_12] : memref<2x8xf32, #tpu.memory_space<vmem>>, vector<2x8xf32>
    tpu.vector_store %arg6[%c0_11, %c0_12], %35 {strides = array<i32>} : memref<2x8xf32, #tpu.memory_space<vmem>>, vector<2x8xf32>,
    %37 = vector.shape_cast %35 : vector<2x8xf32> to vector<2x8x1xf32>
    %38 = vector.broadcast %37 : vector<2x8x1xf32> to vector<2x8x32xf32>
    %39 = arith.mulf %0, %38 : vector<2x8x32xf32>
    %cst_13 = arith.constant dense<0.000000e+00> : vector<2x32xf32>
    %40 = vector.multi_reduction <add>, %39, %cst_13 [1] : vector<2x8x32xf32> to vector<2x32xf32>
    %c0_14 = arith.constant 0 : index
    %c0_15 = arith.constant 0 : index
    %41 = vector.load %arg5[%c0_14, %c0_15] : memref<2x32xf32, #tpu.memory_space<vmem>>, vector<2x32xf32>
    tpu.vector_store %arg5[%c0_14, %c0_15], %40 {strides = array<i32>} : memref<2x32xf32, #tpu.memory_space<vmem>>, vector<2x32xf32>,
    return
  }
  func.func @transform_0(%arg0: i32, %arg1: memref<1xi32, #tpu.memory_space<smem>>) -> (i32, i32) {
    %c0_i32 = arith.constant 0 : i32
    %c0_i32_0 = arith.constant 0 : i32
    return %arg0, %c0_i32 : i32, i32
  }
  func.func @transform_1(%arg0: i32, %arg1: memref<1xi32, #tpu.memory_space<smem>>) -> (i32, i32, i32) {
    %c0_i32 = arith.constant 0 : i32
    %c0_i32_0 = arith.constant 0 : i32
    %c0_i32_1 = arith.constant 0 : i32
    return %arg0, %c0_i32, %c0_i32_0 : i32, i32, i32
  }
  func.func @transform_2(%arg0: i32, %arg1: memref<1xi32, #tpu.memory_space<smem>>) -> (i32, i32) {
    %c0_i32 = arith.constant 0 : i32
    %c0_i32_0 = arith.constant 0 : i32
    %c0_i32_1 = arith.constant 0 : i32
    return %c0_i32, %c0_i32_0 : i32, i32
  }
  func.func @transform_3(%arg0: i32, %arg1: memref<1xi32, #tpu.memory_space<smem>>) -> (i32, i32) {
    %c0_i32 = arith.constant 0 : i32
    %c0_i32_0 = arith.constant 0 : i32
    return %arg0, %c0_i32 : i32, i32
  }
  func.func @transform_4(%arg0: i32, %arg1: memref<1xi32, #tpu.memory_space<smem>>) -> (i32, i32) {
    %c0_i32 = arith.constant 0 : i32
    %c0_i32_0 = arith.constant 0 : i32
    return %arg0, %c0_i32 : i32, i32
  }
}

</mosaic_0001>

<llo_original>
// kernel: self_attention.1
$region0: #{self_attention.1}
  #allocation0 [shape = 'u32[]', space=smem, size = 0x4, offset = 0x4, fixed_abs, tag = 'smem constant byte address 0x4 - core index']
  #allocation1 [shape = 'u32[144,128]{1,0:T(1,128)}', space=vmem, size = 0x12000, scoped, tag = 'internal scratch']
  #allocation2 [shape = 's32[1]{0}', space=sflag, size = 0x4, scoped, tag = 'scoped memory for self_attention.1']
  #allocation3 [shape = 's32[1]{0:T(128)S(6)}', space=smem, size = 0x200, scoped, tag = 'prefetched SMEM operand 0']
  %s0 = inlined_call_operand.<no memory space> [shape: s32[1], index: 0, kind: input, shape index: {}]
  %s1 = inlined_call_operand.vmem [shape: s32[2,1], index: 1, kind: input, shape index: {}]
  %s2 = inlined_call_operand.hbm [shape: f32[2,8,32], index: 2, kind: input, shape index: {}]
  %s3 = inlined_call_operand.vmem [shape: f32[1,32], index: 3, kind: input, shape index: {}]
  %s4 = inlined_call_operand.hbm [shape: f32[2,32], index: 4, kind: output, shape index: {0}]
  %s5 = inlined_call_operand.hbm [shape: f32[2,8], index: 5, kind: output, shape index: {1}]
  %6 = xla_tuple %s4, %s5
  %s7 = sld [smem:[#allocation0]]
  $region34: #{self_attention.1} parent=0
    _
  %s9 = ssub.s32 1, %s7
  %s10 = scalar_select 0, %s9, %s7
  %11 = sst [smem:[#allocation3]] %s0
  $region1: #{self_attention.1} parent=0
    #allocation4 [shape = 'u8[8192]{0}', space=vmem, size = 0x2000, scoped, tag = 'input window, operand 2, single buffered']
    #allocation5 [shape = 's32[1]{0}', space=sflag, size = 0x4, scoped, tag = 'scoped memory for self_attention.1']
    #allocation6 [shape = 's32[1]{0}', space=sflag, size = 0x4, scoped, tag = 'scoped memory for self_attention.1']
    #allocation7 [shape = 'u8[1024]{0}', space=vmem, size = 0x400, scoped, tag = 'output window, operand 0, single buffered']
    #allocation8 [shape = 'u8[1024]{0}', space=vmem, size = 0x400, scoped, tag = 'output window, operand 1, single buffered']
    #allocation9 [shape = 's32[1]{0}', space=sflag, size = 0x4, scoped, tag = 'scoped memory for self_attention.1']
    %12 = vsyncpa [#allocation5], 0
    %13 = vsyncpa [#allocation6], 0
    %14 = vsyncpa [#allocation9], 0
    // Predicated region
    $region2: #{self_attention.1} parent=1 // pred_check
      _
    $region3: #{self_attention.1} parent=1 // pred_check_branch
      %16 = sbr.rel (0) target = $region5
    $region4: #{self_attention.1} parent=1 // pred_region
      _
    $region5: #{self_attention.1} parent=1 // pred_fallthru
      _
    // Predicated region
    $region6: #{self_attention.1} parent=1 // pred_check
      _
    $region7: #{self_attention.1} parent=1 // pred_check_branch
      %18 = sbr.rel (0) target = $region9
    $region8: #{self_attention.1} parent=1 // pred_region
      %s20 = ssub.s32 256, 256
      %21 = vsyncadd [#allocation5], %s20
      %s22 = sshll.u32 [#allocation4], 4
      %s23 = int_to_ptr.vmem [resolvable:$true] %s22
      %28 = dma.hbm_to_vmem [thread:$0]  %s2, 256, %s23, [#allocation5], 128, 128, 8
    $region9: #{self_attention.1} parent=1 // pred_fallthru
      _
    // Predicated region
    $region10: #{self_attention.1} parent=1 // pred_check
      _
    $region11: #{self_attention.1} parent=1 // pred_check_branch
      %30 = sbr.rel (0) target = $region13
    $region12: #{self_attention.1} parent=1 // pred_region
      _
    $region13: #{self_attention.1} parent=1 // pred_fallthru
      _
    // Predicated region
    $region14: #{self_attention.1} parent=1 // pred_check
      _
    $region15: #{self_attention.1} parent=1 // pred_check_branch
      %32 = sbr.rel (0) target = $region17
    $region16: #{self_attention.1} parent=1 // pred_region
      %33 = dma.done [#allocation5], 256
    $region17: #{self_attention.1} parent=1 // pred_fallthru
      _
    %v34 = vld [vmem:[#allocation4] sm:$0xff]
    %v35 = vld [vmem:[#allocation4 + $0x8] sm:$0xff]
    %v36 = vld [vmem:[%s3] sm:$0x1]
    %v37 = vld [vmem:[%s1] sm:$0x3]
    %v39 = vlaneseq
    %v40 = vshrl.u32 %v39, 7
    %v41 = vsub.s32 0, %v40
    %v42 = vrot.slane %v36, %v41
    %v44 = vmul.f32 %v34, %v42
    %v45 = vmul.f32 %v35, %v42
    %vm46 = vcmask 261120
    %v47 = vsel %vm46, %v44, 0.0
    %48 = vadd.xlane.f32.xlu0 %v47
    %v49 = vpop.xlane.xlu0 %48
    %v50 = vsel %vm46, %v45, 0.0
    %51 = vadd.xlane.f32.xlu0 %v50
    %v52 = vpop.xlane.xlu0 %51
    %v53 = vtanh.pop %v49
    %v54 = vtanh.pop %v52
    %s55 = sld [smem:[#allocation3]]
    %v56 = vlaneseq
    %v57 = vand.u32 %v56, 127
    %v58 = vstv %s55
    %vm59 = vcmp.eq.s32.totalorder %v37, %v58
    %60 = vset.pattern.permute.xlu0 0
    %61 = vperm.xlu0 %60, %v37
    %v62 = vpop.permute.xlu0 %61
    %vm63 = vcmp.lt.s32.totalorder %v57, %v62
    %v64 = vsel %vm63, 1, 0
    %v65 = vcvt.s32.f32 %v64
    %v66 = vsel %vm59, 1, 0
    %67 = vset.pattern.permute.xlu0 0
    %68 = vperm.xlu0 %67, %v66
    %v69 = vpop.permute.xlu0 %68
    %vm70 = vcmp.eq.s32.totalorder %v69, 1
    %v71 = vsel %vm70, 1.0, %v65
    %v74 = vlaneseq
    %v75 = vshrl.u32 %v74, 7
    %v76 = vsub.s32 %v57, %v75
    %v77 = vrot.slane %v53, %v76
    %v78 = vlaneseq
    %v79 = vshrl.u32 %v78, 7
    %v80 = vsub.s32 %v57, %v79
    %v81 = vrot.slane %v54, %v80
    %vm82 = vcmask 1041409
    %v83 = vsel %vm82, %v81, %v77
    %vm85 = vcmask 58368
    %v86 = vsel %vm85, %v83, -inf
    %87 = vmax.xlane.f32.xlu0 %v86
    %v88 = vpop.xlane.xlu0 %87
    %v90 = vlaneseq
    %v91 = vshrl.u32 %v90, 7
    %v92 = vsub.s32 0, %v91
    %v93 = vrot.slane %v88, %v92
    %v94 = vlaneseq
    %v95 = vshrl.u32 %v94, 7
    %v96 = vsub.s32 1, %v95
    %v97 = vrot.slane %v88, %v96
    %v100 = vsub.f32 %v53, %v93
    %v101 = vsub.f32 %v54, %v97
    %v102 = vmul.f32 %v100, 1.442695
    %v103 = vpow.pop %v102
    %v104 = vmul.f32 %v101, 1.442695
    %v105 = vpow.pop %v104
    %108 = vset.pattern.permute.xlu0 0
    %109 = vperm.xlu0 %108, %v103
    %v110 = vpop.permute.xlu0 %109
    %111 = vset.pattern.permute.xlu0 0
    %112 = vperm.xlu0 %111, %v105
    %v113 = vpop.permute.xlu0 %112
    %v114 = vlaneseq
    %v115 = vshrl.u32 %v114, 7
    %v116 = vsub.s32 %v57, %v115
    %v117 = vrot.slane %v110, %v116
    %v118 = vlaneseq
    %v119 = vshrl.u32 %v118, 7
    %v120 = vsub.s32 %v57, %v119
    %v121 = vrot.slane %v113, %v120
    %v122 = vsel %vm82, %v121, %v117
    %v124 = vmul.f32 %v71, %v122
    %v125 = vsel %vm85, %v124, 0.0
    %126 = vadd.xlane.f32.xlu0 %v125
    %v127 = vpop.xlane.xlu0 %126
    %v128 = vrcp.pop %v127
    %v129 = vmul.f32 %v127, %v128
    %v130 = vsub.f32 2.0, %v129
    %v131 = vmul.f32 %v128, %v130
    %v132 = vmul.f32 %v124, %v131
    %133 = vst.msk [vmem:[#allocation8] sm:$0x3] %vm85, %v132
    %v134 = vlaneseq
    %v135 = vshrl.u32 %v134, 7
    %v136 = vsub.s32 0, %v135
    %v137 = vrot.slane %v132, %v136
    %139 = vbcast.lane.b32.xlu0 %v137, 256
    %v140 = vpop.permute.xlu0 %139
    %v141 = vlaneseq
    %v142 = vshrl.u32 %v141, 7
    %v143 = vsub.s32 1, %v142
    %v144 = vrot.slane %v132, %v143
    %146 = vbcast.lane.b32.xlu0 %v144, 256
    %v147 = vpop.permute.xlu0 %146
    %v148 = vmul.f32 %v34, %v140
    %v149 = vmul.f32 %v35, %v147
    %v150 = vsel %vm46, %v148, 0.0
    %v151 = vrot.slane %v150, 4
    %v152 = vadd.f32 %v150, %v151
    %v153 = vrot.slane %v152, 2
    %v154 = vadd.f32 %v152, %v153
    %v155 = vrot.slane %v154, 1
    %v156 = vadd.f32 %v154, %v155
    %v157 = vsel %vm46, %v149, 0.0
    %v158 = vrot.slane %v157, 4
    %v159 = vadd.f32 %v157, %v158
    %v160 = vrot.slane %v159, 2
    %v161 = vadd.f32 %v159, %v160
    %v162 = vrot.slane %v161, 1
    %v163 = vadd.f32 %v161, %v162
    %v166 = vsel %vm82, %v163, %v156
    %vm168 = vcmask 254976
    %169 = vst.msk [vmem:[#allocation7] sm:$0x3] %vm168, %v166
    // Predicated region
    $region18: #{self_attention.1} parent=1 // pred_check
      _
    $region19: #{self_attention.1} parent=1 // pred_check_branch
      %171 = sbr.rel (0) target = $region21
    $region20: #{self_attention.1} parent=1 // pred_region
      %s173 = ssub.s32 32, 32
      %174 = vsyncadd [#allocation6], %s173
      %s176 = sshll.u32 [#allocation7], 4
      %s177 = int_to_ptr.vmem [resolvable:$true] %s176
      %179 = dma.vmem_to_hbm [thread:$0]  %s177, 32, %s4, [#allocation6]
    $region21: #{self_attention.1} parent=1 // pred_fallthru
      _
    // Predicated region
    $region22: #{self_attention.1} parent=1 // pred_check
      _
    $region23: #{self_attention.1} parent=1 // pred_check_branch
      %181 = sbr.rel (0) target = $region25
    $region24: #{self_attention.1} parent=1 // pred_region
      %s183 = ssub.s32 32, 32
      %184 = vsyncadd [#allocation9], %s183
      %s186 = sshll.u32 [#allocation8], 4
      %s187 = int_to_ptr.vmem [resolvable:$true] %s186
      %189 = dma.vmem_to_hbm [thread:$0]  %s187, 32, %s5, [#allocation9]
    $region25: #{self_attention.1} parent=1 // pred_fallthru
      _
    // Predicated region
    $region26: #{self_attention.1} parent=1 // pred_check
      _
    $region27: #{self_attention.1} parent=1 // pred_check_branch
      %191 = sbr.rel (0) target = $region29
    $region28: #{self_attention.1} parent=1 // pred_region
      %192 = dma.done [#allocation6], 32
    $region29: #{self_attention.1} parent=1 // pred_fallthru
      _
    // Predicated region
    $region30: #{self_attention.1} parent=1 // pred_check
      _
    $region31: #{self_attention.1} parent=1 // pred_check_branch
      %194 = sbr.rel (0) target = $region33
    $region32: #{self_attention.1} parent=1 // pred_region
      %195 = dma.done [#allocation9], 32
    $region33: #{self_attention.1} parent=1 // pred_fallthru
      _
    %196 = vsyncpa [#allocation5], 1
    %197 = vsyncpa [#allocation6], 1
    %198 = vsyncpa [#allocation9], 1

</llo_original>
